<compile_context>
chip_gen: v6e
topology: v6e:2x2x1
jax: 0.10.0
libtpu: 0.0.40
codegen_flags: <defaults>
</compile_context>

<pallas_src>
import functools

import jax
import jax.numpy as jnp
from jax.experimental import pallas as pl
from jax.experimental.pallas import tpu as pltpu


# ------------------------------ Fused kernel -------------------------------- #

def _bottleneck_kernel(x_ref, s1_ref, b1_ref, w1_ref, b2_ref, w2_ref,
                       b3_ref, w3_ref, o_ref, *, H):
    """nb images per grid step, activations as a flat (nb*H, W*C) slab."""
    f32, bf16 = jnp.float32, jnp.bfloat16
    M, WCin = x_ref.shape
    WCmid = b2_ref.shape[-1]

    x = x_ref[...]                                                   # (M, WCin) f32

    # Stage 1: conv1(relu(bn1(x)));  BN2 scale is pre-folded into w1 columns.
    h1 = jnp.maximum(x * s1_ref[...] + b1_ref[...], 0.0)
    y1 = jnp.dot(h1.astype(bf16), w1_ref[...], preferred_element_type=f32)
    h2 = jnp.maximum(y1 + b2_ref[...], 0.0)                         # (M, WCmid)

    # Stage 2: 3x3 conv as ONE matmul.  Width (dx) mixing + zero padding is
    # baked into the stacked banded weight; height (dy) shifts are XLU rolls
    # whose wrapped / cross-image boundary rows are zeroed with an iota mask.
    h_idx = jax.lax.broadcasted_iota(jnp.int32, (M, WCmid), 0) % H
    up = jnp.where(h_idx == 0, 0.0, pltpu.roll(h2, 1, axis=0))            # row h <- h-1
    down = jnp.where(h_idx == H - 1, 0.0, pltpu.roll(h2, M - 1, axis=0))  # row h <- h+1
    z = jnp.concatenate([up, h2, down], axis=1).astype(bf16)        # (M, 3*WCmid)
    y2 = jnp.dot(z, w2_ref[...], preferred_element_type=f32)        # BN3 scale folded in
    h3 = jnp.maximum(y2 + b3_ref[...], 0.0)

    # Stage 3: conv_proj(x) + conv3(h3) as ONE matmul with stacked weights.
    cat = jnp.concatenate([x.astype(bf16), h3.astype(bf16)], axis=1)  # (M, WCin+WCmid)
    out = jnp.dot(cat, w3_ref[...], preferred_element_type=f32)       # (M, WCout)
    o_ref[...] = out.astype(o_ref.dtype)


# ------------------------------ Forward pass -------------------------------- #

def bottleneck_forward(x_nchw, params, *, images_per_step=None):
    N, Cin, H, W = x_nchw.shape
    WCin = W * Cin
    WCmid = params["b2"].shape[1]
    WCout = params["w3s"].shape[1]
    Cout = WCout // W

    # Images per grid step: make matmul M = nb*H as large as practical (the
    # grid is a serial loop on v5e/v6e); on v7x choose nb = N//2 to feed both
    # TensorCores.
    if images_per_step is None:
        images_per_step = min(N, max(1, 128 // H))
    nb = max(1, min(N, images_per_step))
    while N % nb:
        nb -= 1
    Mblk = nb * H

    # NCHW -> flat lane-dense (N*H, W*Cin) layout (layout glue only; keep this
    # layout end-to-end when the block is embedded in a network).
    x2d = jnp.transpose(x_nchw, (0, 2, 3, 1)).reshape(N * H, WCin)

    def resident(shape):   # weights / folded-BN rows: same block every step
        return pl.BlockSpec(shape, lambda n: (0, 0))

    kernel = functools.partial(_bottleneck_kernel, H=H)

    out2d = pl.pallas_call(
        kernel,
        out_shape=jax.ShapeDtypeStruct((N * H, WCout), jnp.float32),
        grid=(N // nb,),
        in_specs=[
            pl.BlockSpec((Mblk, WCin), lambda n: (n, 0)),   # x (nb images)
            resident((1, WCin)), resident((1, WCin)),       # s1, b1 (f32)
            resident((WCin, WCmid)),                        # w1 (bf16, s2 folded)
            resident((1, WCmid)),                           # b2 (f32)
            resident((3 * WCmid, WCmid)),                   # stacked banded 3x3 (bf16, s3 folded)
            resident((1, WCmid)),                           # b3 (f32)
            resident((WCin + WCmid, WCout)),                # stacked [wp ; w3] (bf16)
        ],
        out_specs=pl.BlockSpec((Mblk, WCout), lambda n: (n, 0)),
        compiler_params=pltpu.CompilerParams(
            dimension_semantics=("parallel",)),
    )(x2d, params["s1"], params["b1"], params["w1s"], params["b2"],
      params["w2s"], params["b3"], params["w3s"])

    out = out2d.reshape(N, H, W, Cout)
    return jnp.transpose(out, (0, 3, 1, 2))   # back to NCHW


# --------------------------- Parameter creation ------------------------------ #

def make_params(key, in_dim, out_dim, H, W):
    Cmid = in_dim // 4
    eps = 1e-5
    ks = jax.random.split(key, 8)

    def bn_fold(k, c):
        k1, k2, k3, k4 = jax.random.split(k, 4)
        gamma = jax.random.uniform(k1, (c,), minval=0.5, maxval=1.5)
        beta = jax.random.normal(k2, (c,)) * 0.1
        mean = jax.random.normal(k3, (c,)) * 0.1
        var = jax.random.uniform(k4, (c,), minval=0.5, maxval=1.5)
        scale = (gamma / jnp.sqrt(var + eps)).astype(jnp.float32)
        shift = (beta - mean * scale).astype(jnp.float32)
        return scale, shift

    s1, b1 = bn_fold(ks[0], in_dim)
    s2, b2 = bn_fold(ks[1], Cmid)
    s3, b3 = bn_fold(ks[2], Cmid)

    # PyTorch-layout OIHW conv weights (reference path uses these directly).
    w1_oihw = (jax.random.normal(ks[3], (Cmid, in_dim, 1, 1)) * 0.2).astype(jnp.float32)
    w2_oihw = (jax.random.normal(ks[4], (Cmid, Cmid, 3, 3)) * 0.2).astype(jnp.float32)
    w3_oihw = (jax.random.normal(ks[5], (out_dim, Cmid, 1, 1)) * 0.2).astype(jnp.float32)
    wp_oihw = (jax.random.normal(ks[6], (out_dim, in_dim, 1, 1)) * 0.2).astype(jnp.float32)

    eyeW = jnp.eye(W, dtype=jnp.float32)

    def block_diag_1x1(w_oihw):          # (O, I, 1, 1) -> (W*I, W*O)
        return jnp.kron(eyeW, w_oihw[:, :, 0, 0].T)

    def banded_3x3(w_oihw):              # (O, I, 3, 3) -> 3 x (W*I, W*O), one per dy
        mats = []
        for ky in range(3):
            B = sum(jnp.kron(jnp.eye(W, k=-(kx - 1), dtype=jnp.float32),
                             w_oihw[:, :, ky, kx].T)
                    for kx in range(3))
            mats.append(B)
        return mats

    def tile_row(v):                     # per-channel (C,) -> lane-dense (1, W*C)
        return jnp.tile(v, W)[None, :]

    bm, b0, bp = banded_3x3(w2_oihw)     # dy = -1, 0, +1
    bf16 = jnp.bfloat16

    # Post-matmul BN scales folded into weight columns (commutes with matmul);
    # weights stored bf16 for the MXU, BN rows stay f32.
    w1s = (block_diag_1x1(w1_oihw) * tile_row(s2)).astype(bf16)                # (W*Cin, W*Cmid)
    w2s = (jnp.concatenate([bm, b0, bp], axis=0) * tile_row(s3)).astype(bf16)  # (3*W*Cmid, W*Cmid)
    w3s = jnp.concatenate([block_diag_1x1(wp_oihw),                            # rows for x
                           block_diag_1x1(w3_oihw)], axis=0).astype(bf16)      # rows for h3

    return {
        # kernel-layout parameters
        "s1": tile_row(s1), "b1": tile_row(b1),
        "b2": tile_row(b2), "b3": tile_row(b3),
        "w1s": w1s, "w2s": w2s, "w3s": w3s,
        # reference-layout parameters
        "ref": {
            "s1": s1, "b1": b1, "s2": s2, "b2": b2, "s3": s3, "b3": b3,
            "w1": w1_oihw, "w2": w2_oihw, "w3": w3_oihw, "wp": wp_oihw,
        },
    }


# ------------------------------ Pure-JAX reference --------------------------- #

def ref_forward(x, params):
    r = params["ref"]

    def bn(t, s, b):
        return t * s[None, :, None, None] + b[None, :, None, None]

    def conv(t, w, pad=0):
        return jax.lax.conv_general_dilated(
            t, w, (1, 1), [(pad, pad), (pad, pad)],
            dimension_numbers=("NCHW", "OIHW", "NCHW"),
            precision=jax.lax.Precision.HIGHEST)

    y = conv(jax.nn.relu(bn(x, r["s1"], r["b1"])), r["w1"])
    y = conv(jax.nn.relu(bn(y, r["s2"], r["b2"])), r["w2"], pad=1)
    y = conv(jax.nn.relu(bn(y, r["s3"], r["b3"])), r["w3"])
    x_proj = conv(x, r["wp"])
    return x_proj + y


# ----------------------------------- Main ------------------------------------ #

if __name__ == "__main__":
    key = jax.random.PRNGKey(0)
    kx, kp = jax.random.split(key)

    N, in_dim, out_dim, H, W = 2, 16, 32, 16, 16
    x = jax.random.normal(kx, (N, in_dim, H, W), dtype=jnp.float32)
    params = make_params(kp, in_dim, out_dim, H, W)

    fwd = jax.jit(bottleneck_forward)
    out = jax.block_until_ready(fwd(x, params))

    ref = ref_forward(x, params)
    assert out.shape == (N, out_dim, H, W), out.shape
    # bf16 MXU operands (with f32 accumulation) -> slightly looser tolerance.
    max_err = float(jnp.max(jnp.abs(out - ref)))
    assert jnp.allclose(out, ref, atol=2e-2, rtol=2e-2), max_err

    print("KERNEL_OK")
</pallas_src>

<mosaic_0001>
module attributes {stable_mosaic.version = 11 : i64} {
  func.func @_bottleneck_kernel(%arg0: i32, %arg1: memref<32x256xf32, #tpu.memory_space<vmem>>, %arg2: memref<1x256xf32, #tpu.memory_space<vmem>>, %arg3: memref<1x256xf32, #tpu.memory_space<vmem>>, %arg4: memref<256x64xbf16, #tpu.memory_space<vmem>>, %arg5: memref<1x64xf32, #tpu.memory_space<vmem>>, %arg6: memref<192x64xbf16, #tpu.memory_space<vmem>>, %arg7: memref<1x64xf32, #tpu.memory_space<vmem>>, %arg8: memref<320x512xbf16, #tpu.memory_space<vmem>>, %arg9: memref<32x512xf32, #tpu.memory_space<vmem>>) attributes {dimension_semantics = [#tpu.dimension_semantics<parallel>], iteration_bounds = array<i64: 1>, scalar_prefetch = 0 : i64, scratch_operands = 0 : i64, tpu.core_type = #tpu.core_type<tc>, window_params = [{transform_indices = @transform_0, window_bounds = array<i64: 32, 256>}, {pipeline_mode = #tpu.pipeline_mode<synchronous>, transform_indices = @transform_1, window_bounds = array<i64: 1, 256>}, {pipeline_mode = #tpu.pipeline_mode<synchronous>, transform_indices = @transform_2, window_bounds = array<i64: 1, 256>}, {pipeline_mode = #tpu.pipeline_mode<synchronous>, transform_indices = @transform_3, window_bounds = array<i64: 256, 64>}, {pipeline_mode = #tpu.pipeline_mode<synchronous>, transform_indices = @transform_4, window_bounds = array<i64: 1, 64>}, {pipeline_mode = #tpu.pipeline_mode<synchronous>, transform_indices = @transform_5, window_bounds = array<i64: 192, 64>}, {pipeline_mode = #tpu.pipeline_mode<synchronous>, transform_indices = @transform_6, window_bounds = array<i64: 1, 64>}, {pipeline_mode = #tpu.pipeline_mode<synchronous>, transform_indices = @transform_7, window_bounds = array<i64: 320, 512>}, {transform_indices = @transform_8, window_bounds = array<i64: 32, 512>}]} {
    %c0 = arith.constant 0 : index
    %c0_0 = arith.constant 0 : index
    %0 = vector.load %arg1[%c0, %c0_0] : memref<32x256xf32, #tpu.memory_space<vmem>>, vector<32x256xf32>
    %c0_1 = arith.constant 0 : index
    %c0_2 = arith.constant 0 : index
    %1 = vector.load %arg2[%c0_1, %c0_2] : memref<1x256xf32, #tpu.memory_space<vmem>>, vector<1x256xf32>
    %2 = vector.broadcast %1 : vector<1x256xf32> to vector<32x256xf32>
    %3 = arith.mulf %0, %2 : vector<32x256xf32>
    %c0_3 = arith.constant 0 : index
    %c0_4 = arith.constant 0 : index
    %4 = vector.load %arg3[%c0_3, %c0_4] : memref<1x256xf32, #tpu.memory_space<vmem>>, vector<1x256xf32>
    %5 = vector.broadcast %4 : vector<1x256xf32> to vector<32x256xf32>
    %6 = arith.addf %3, %5 : vector<32x256xf32>
    %cst = arith.constant 0.000000e+00 : f32
    %7 = vector.broadcast %cst : f32 to vector<32x256xf32>
    %8 = arith.maximumf %6, %7 : vector<32x256xf32>
    %9 = arith.truncf %8 : vector<32x256xf32> to vector<32x256xbf16>
    %c0_5 = arith.constant 0 : index
    %c0_6 = arith.constant 0 : index
    %10 = vector.load %arg4[%c0_5, %c0_6] : memref<256x64xbf16, #tpu.memory_space<vmem>>, vector<256x64xbf16>
    %cst_7 = arith.constant dense<0.000000e+00> : vector<32x64xf32>
    %11 = tpu.matmul %9, %10, %cst_7 {dimension_numbers = #tpu.dot_dimension_numbers<[1], [0], [0], [1], [0, 0, 1, 1], [], []>} : vector<32x256xbf16>, vector<256x64xbf16>, vector<32x64xf32> -> vector<32x64xf32>
    %c0_8 = arith.constant 0 : index
    %c0_9 = arith.constant 0 : index
    %12 = vector.load %arg5[%c0_8, %c0_9] : memref<1x64xf32, #tpu.memory_space<vmem>>, vector<1x64xf32>
    %13 = vector.broadcast %12 : vector<1x64xf32> to vector<32x64xf32>
    %14 = arith.addf %11, %13 : vector<32x64xf32>
    %cst_10 = arith.constant 0.000000e+00 : f32
    %15 = vector.broadcast %cst_10 : f32 to vector<32x64xf32>
    %16 = arith.maximumf %14, %15 : vector<32x64xf32>
    %17 = tpu.iota {dimensions = array<i32: 0>} : vector<32x64xi32>
    %c16_i32 = arith.constant 16 : i32
    %c0_i32 = arith.constant 0 : i32
    %18 = arith.cmpi eq, %c16_i32, %c0_i32 : i32
    %c1_i32 = arith.constant 1 : i32
    %19 = arith.select %18, %c1_i32, %c16_i32 : i32
    %20 = vector.broadcast %19 : i32 to vector<32x64xi32>
    %21 = arith.remsi %17, %20 : vector<32x64xi32>
    %c0_i32_11 = arith.constant 0 : i32
    %22 = vector.broadcast %c0_i32_11 : i32 to vector<32x64xi32>
    %23 = arith.cmpi ne, %21, %22 : vector<32x64xi32>
    %c0_i32_12 = arith.constant 0 : i32
    %24 = vector.broadcast %c0_i32_12 : i32 to vector<32x64xi32>
    %25 = arith.cmpi slt, %21, %24 : vector<32x64xi32>
    %c0_i32_13 = arith.constant 0 : i32
    %26 = arith.cmpi slt, %19, %c0_i32_13 : i32
    %27 = vector.broadcast %26 : i1 to vector<32x64xi1>
    %28 = vector.broadcast %27 : vector<32x64xi1> to vector<32x64xi1>
    %29 = arith.xori %25, %28 : vector<32x64xi1>
    %30 = arith.andi %29, %23 : vector<32x64xi1>
    %31 = vector.broadcast %19 : i32 to vector<32x64xi32>
    %32 = arith.addi %21, %31 : vector<32x64xi32>
    %33 = arith.select %30, %32, %21 : vector<32x64xi1>, vector<32x64xi32>
    %c0_i32_14 = arith.constant 0 : i32
    %34 = vector.broadcast %c0_i32_14 : i32 to vector<32x64xi32>
    %35 = arith.cmpi eq, %33, %34 : vector<32x64xi32>
    %c1_i32_15 = arith.constant 1 : i32
    %36 = tpu.dynamic_rotate %16 by %c1_i32_15 dim 0 : vector<32x64xf32>, i32 -> vector<32x64xf32>
    %cst_16 = arith.constant 0.000000e+00 : f32
    %37 = vector.broadcast %cst_16 : f32 to vector<32x64xf32>
    %38 = arith.select %35, %37, %36 : vector<32x64xi1>, vector<32x64xf32>
    %c15_i32 = arith.constant 15 : i32
    %39 = vector.broadcast %c15_i32 : i32 to vector<32x64xi32>
    %40 = arith.cmpi eq, %33, %39 : vector<32x64xi32>
    %c31_i32 = arith.constant 31 : i32
    %41 = tpu.dynamic_rotate %16 by %c31_i32 dim 0 : vector<32x64xf32>, i32 -> vector<32x64xf32>
    %cst_17 = arith.constant 0.000000e+00 : f32
    %42 = vector.broadcast %cst_17 : f32 to vector<32x64xf32>
    %43 = arith.select %40, %42, %41 : vector<32x64xi1>, vector<32x64xf32>
    %44 = tpu.concatenate %38, %16, %43 in 1 : vector<32x64xf32>, vector<32x64xf32>, vector<32x64xf32> -> vector<32x192xf32>
    %45 = arith.truncf %44 : vector<32x192xf32> to vector<32x192xbf16>
    %c0_18 = arith.constant 0 : index
    %c0_19 = arith.constant 0 : index
    %46 = vector.load %arg6[%c0_18, %c0_19] : memref<192x64xbf16, #tpu.memory_space<vmem>>, vector<192x64xbf16>
    %cst_20 = arith.constant dense<0.000000e+00> : vector<32x64xf32>
    %47 = tpu.matmul %45, %46, %cst_20 {dimension_numbers = #tpu.dot_dimension_numbers<[1], [0], [0], [1], [0, 0, 1, 1], [], []>} : vector<32x192xbf16>, vector<192x64xbf16>, vector<32x64xf32> -> vector<32x64xf32>
    %c0_21 = arith.constant 0 : index
    %c0_22 = arith.constant 0 : index
    %48 = vector.load %arg7[%c0_21, %c0_22] : memref<1x64xf32, #tpu.memory_space<vmem>>, vector<1x64xf32>
    %49 = vector.broadcast %48 : vector<1x64xf32> to vector<32x64xf32>
    %50 = arith.addf %47, %49 : vector<32x64xf32>
    %cst_23 = arith.constant 0.000000e+00 : f32
    %51 = vector.broadcast %cst_23 : f32 to vector<32x64xf32>
    %52 = arith.maximumf %50, %51 : vector<32x64xf32>
    %53 = arith.truncf %0 : vector<32x256xf32> to vector<32x256xbf16>
    %54 = arith.truncf %52 : vector<32x64xf32> to vector<32x64xbf16>
    %55 = tpu.concatenate %53, %54 in 1 : vector<32x256xbf16>, vector<32x64xbf16> -> vector<32x320xbf16>
    %c0_24 = arith.constant 0 : index
    %c0_25 = arith.constant 0 : index
    %56 = vector.load %arg8[%c0_24, %c0_25] : memref<320x512xbf16, #tpu.memory_space<vmem>>, vector<320x512xbf16>
    %cst_26 = arith.constant dense<0.000000e+00> : vector<32x512xf32>
    %57 = tpu.matmul %55, %56, %cst_26 {dimension_numbers = #tpu.dot_dimension_numbers<[1], [0], [0], [1], [0, 0, 1, 1], [], []>} : vector<32x320xbf16>, vector<320x512xbf16>, vector<32x512xf32> -> vector<32x512xf32>
    %c0_27 = arith.constant 0 : index
    %c0_28 = arith.constant 0 : index
    %58 = vector.load %arg9[%c0_27, %c0_28] : memref<32x512xf32, #tpu.memory_space<vmem>>, vector<32x512xf32>
    tpu.vector_store %arg9[%c0_27, %c0_28], %57 {strides = array<i32>} : memref<32x512xf32, #tpu.memory_space<vmem>>, vector<32x512xf32>,
    return
  }
  func.func @transform_0(%arg0: i32) -> (i32, i32) {
    %c0_i32 = arith.constant 0 : i32
    %c0_i32_0 = arith.constant 0 : i32
    return %arg0, %c0_i32 : i32, i32
  }
  func.func @transform_1(%arg0: i32) -> (i32, i32) {
    %c0_i32 = arith.constant 0 : i32
    %c0_i32_0 = arith.constant 0 : i32
    %c0_i32_1 = arith.constant 0 : i32
    return %c0_i32, %c0_i32_0 : i32, i32
  }
  func.func @transform_2(%arg0: i32) -> (i32, i32) {
    %c0_i32 = arith.constant 0 : i32
    %c0_i32_0 = arith.constant 0 : i32
    %c0_i32_1 = arith.constant 0 : i32
    return %c0_i32, %c0_i32_0 : i32, i32
  }
  func.func @transform_3(%arg0: i32) -> (i32, i32) {
    %c0_i32 = arith.constant 0 : i32
    %c0_i32_0 = arith.constant 0 : i32
    %c0_i32_1 = arith.constant 0 : i32
    return %c0_i32, %c0_i32_0 : i32, i32
  }
  func.func @transform_4(%arg0: i32) -> (i32, i32) {
    %c0_i32 = arith.constant 0 : i32
    %c0_i32_0 = arith.constant 0 : i32
    %c0_i32_1 = arith.constant 0 : i32
    return %c0_i32, %c0_i32_0 : i32, i32
  }
  func.func @transform_5(%arg0: i32) -> (i32, i32) {
    %c0_i32 = arith.constant 0 : i32
    %c0_i32_0 = arith.constant 0 : i32
    %c0_i32_1 = arith.constant 0 : i32
    return %c0_i32, %c0_i32_0 : i32, i32
  }
  func.func @transform_6(%arg0: i32) -> (i32, i32) {
    %c0_i32 = arith.constant 0 : i32
    %c0_i32_0 = arith.constant 0 : i32
    %c0_i32_1 = arith.constant 0 : i32
    return %c0_i32, %c0_i32_0 : i32, i32
  }
  func.func @transform_7(%arg0: i32) -> (i32, i32) {
    %c0_i32 = arith.constant 0 : i32
    %c0_i32_0 = arith.constant 0 : i32
    %c0_i32_1 = arith.constant 0 : i32
    return %c0_i32, %c0_i32_0 : i32, i32
  }
  func.func @transform_8(%arg0: i32) -> (i32, i32) {
    %c0_i32 = arith.constant 0 : i32
    %c0_i32_0 = arith.constant 0 : i32
    return %arg0, %c0_i32 : i32, i32
  }
}

</mosaic_0001>

<llo_original>
// kernel: bottleneck_forward.1
$region0: #{bottleneck_forward.1}
  #allocation0 [shape = 'u32[]', space=smem, size = 0x4, offset = 0x4, fixed_abs, tag = 'smem constant byte address 0x4 - core index']
  #allocation1 [shape = 'u32[144,128]{1,0:T(1,128)}', space=vmem, size = 0x12000, scoped, tag = 'internal scratch']
  %s0 = inlined_call_operand.vmem [shape: f32[32,256], index: 0, kind: input, shape index: {}]
  %s1 = inlined_call_operand.vmem [shape: f32[1,256], index: 1, kind: input, shape index: {}]
  %s2 = inlined_call_operand.vmem [shape: f32[1,256], index: 2, kind: input, shape index: {}]
  %s3 = inlined_call_operand.vmem [shape: bf16[256,64], index: 3, kind: input, shape index: {}]
  %s4 = inlined_call_operand.vmem [shape: f32[1,64], index: 4, kind: input, shape index: {}]
  %s5 = inlined_call_operand.vmem [shape: bf16[192,64], index: 5, kind: input, shape index: {}]
  %s6 = inlined_call_operand.vmem [shape: f32[1,64], index: 6, kind: input, shape index: {}]
  %s7 = inlined_call_operand.vmem [shape: bf16[320,512], index: 7, kind: input, shape index: {}]
  %s8 = inlined_call_operand.vmem [shape: f32[32,512], index: 8, kind: output, shape index: {}]
  %s9 = sld [smem:[#allocation0]]
  $region42: #{bottleneck_forward.1} parent=0
    _
  %s11 = ssub.s32 1, %s9
  %s12 = scalar_select 0, %s11, %s9
  // Predicated region
  $region2: #{bottleneck_forward.1} parent=0 // pred_check
    _
  $region3: #{bottleneck_forward.1} parent=0 // pred_check_branch
    %14 = sbr.rel (0) target = $region5
  $region4: #{bottleneck_forward.1} parent=0 // pred_region
    _
  $region5: #{bottleneck_forward.1} parent=0 // pred_fallthru
    _
  // Predicated region
  $region6: #{bottleneck_forward.1} parent=0 // pred_check
    _
  $region7: #{bottleneck_forward.1} parent=0 // pred_check_branch
    %16 = sbr.rel (0) target = $region9
  $region8: #{bottleneck_forward.1} parent=0 // pred_region
    _
  $region9: #{bottleneck_forward.1} parent=0 // pred_fallthru
    _
  // Predicated region
  $region10: #{bottleneck_forward.1} parent=0 // pred_check
    _
  $region11: #{bottleneck_forward.1} parent=0 // pred_check_branch
    %18 = sbr.rel (0) target = $region13
  $region12: #{bottleneck_forward.1} parent=0 // pred_region
    _
  $region13: #{bottleneck_forward.1} parent=0 // pred_fallthru
    _
  // Predicated region
  $region14: #{bottleneck_forward.1} parent=0 // pred_check
    _
  $region15: #{bottleneck_forward.1} parent=0 // pred_check_branch
    %20 = sbr.rel (0) target = $region17
  $region16: #{bottleneck_forward.1} parent=0 // pred_region
    _
  $region17: #{bottleneck_forward.1} parent=0 // pred_fallthru
    _
  // Predicated region
  $region18: #{bottleneck_forward.1} parent=0 // pred_check
    _
  $region19: #{bottleneck_forward.1} parent=0 // pred_check_branch
    %22 = sbr.rel (0) target = $region21
  $region20: #{bottleneck_forward.1} parent=0 // pred_region
    _
  $region21: #{bottleneck_forward.1} parent=0 // pred_fallthru
    _
  // Predicated region
  $region22: #{bottleneck_forward.1} parent=0 // pred_check
    _
  $region23: #{bottleneck_forward.1} parent=0 // pred_check_branch
    %24 = sbr.rel (0) target = $region25
  $region24: #{bottleneck_forward.1} parent=0 // pred_region
    _
  $region25: #{bottleneck_forward.1} parent=0 // pred_fallthru
    _
  // Predicated region
  $region26: #{bottleneck_forward.1} parent=0 // pred_check
    _
  $region27: #{bottleneck_forward.1} parent=0 // pred_check_branch
    %26 = sbr.rel (0) target = $region29
  $region28: #{bottleneck_forward.1} parent=0 // pred_region
    _
  $region29: #{bottleneck_forward.1} parent=0 // pred_fallthru
    _
  // Predicated region
  $region30: #{bottleneck_forward.1} parent=0 // pred_check
    _
  $region31: #{bottleneck_forward.1} parent=0 // pred_check_branch
    %28 = sbr.rel (0) target = $region33
  $region32: #{bottleneck_forward.1} parent=0 // pred_region
    _
  $region33: #{bottleneck_forward.1} parent=0 // pred_fallthru
    _
  %v30 = vld [vmem:[%s0] sm:$0xff]
  %v31 = vld [vmem:[%s0 + $0x8] sm:$0xff]
  %v32 = vld [vmem:[%s0 + $0x10] sm:$0xff]
  %v33 = vld [vmem:[%s0 + $0x18] sm:$0xff]
  %v34 = vld [vmem:[%s0 + $0x20] sm:$0xff]
  %v35 = vld [vmem:[%s0 + $0x28] sm:$0xff]
  %v36 = vld [vmem:[%s0 + $0x30] sm:$0xff]
  %v37 = vld [vmem:[%s0 + $0x38] sm:$0xff]
  %v38 = vld [vmem:[%s1] sm:$0x3]
  %v40 = vlaneseq
  %v41 = vshrl.u32 %v40, 7
  %v42 = vsub.s32 0, %v41
  %v43 = vrot.slane %v38, %v42
  %v44 = vlaneseq
  %v45 = vshrl.u32 %v44, 7
  %v46 = vsub.s32 1, %v45
  %v47 = vrot.slane %v38, %v46
  %v50 = vmul.f32 %v30, %v43
  %v51 = vmul.f32 %v31, %v47
  %v52 = vmul.f32 %v32, %v43
  %v53 = vmul.f32 %v33, %v47
  %v54 = vmul.f32 %v34, %v43
  %v55 = vmul.f32 %v35, %v47
  %v56 = vmul.f32 %v36, %v43
  %v57 = vmul.f32 %v37, %v47
  %v58 = vld [vmem:[%s2] sm:$0x3]
  %v60 = vlaneseq
  %v61 = vshrl.u32 %v60, 7
  %v62 = vsub.s32 0, %v61
  %v63 = vrot.slane %v58, %v62
  %v64 = vlaneseq
  %v65 = vshrl.u32 %v64, 7
  %v66 = vsub.s32 1, %v65
  %v67 = vrot.slane %v58, %v66
  %v70 = vadd.f32 %v50, %v63
  %v71 = vadd.f32 %v51, %v67
  %v72 = vadd.f32 %v52, %v63
  %v73 = vadd.f32 %v53, %v67
  %v74 = vadd.f32 %v54, %v63
  %v75 = vadd.f32 %v55, %v67
  %v76 = vadd.f32 %v56, %v63
  %v77 = vadd.f32 %v57, %v67
  %v78 = vmax.f32 %v70, 0.0
  %v79 = vmax.f32 %v71, 0.0
  %v80 = vmax.f32 %v72, 0.0
  %v81 = vmax.f32 %v73, 0.0
  %v82 = vmax.f32 %v74, 0.0
  %v83 = vmax.f32 %v75, 0.0
  %v84 = vmax.f32 %v76, 0.0
  %v85 = vmax.f32 %v77, 0.0
  %v86 = vpack.c.bf16 %v80, %v78
  %v87 = vpack.c.bf16 %v81, %v79
  %v88 = vpack.c.bf16 %v84, %v82
  %v89 = vpack.c.bf16 %v85, %v83
  %v90 = vld [vmem:[%s3] sm:$0xf]
  %v91 = vld [vmem:[%s3 + $0x4] sm:$0xf]
  %v92 = vld [vmem:[%s3 + $0x8] sm:$0xf]
  %v93 = vld [vmem:[%s3 + $0xc] sm:$0xf]
  %v94 = vld [vmem:[%s3 + $0x10] sm:$0xf]
  %v95 = vld [vmem:[%s3 + $0x14] sm:$0xf]
  %v96 = vld [vmem:[%s3 + $0x18] sm:$0xf]
  %v97 = vld [vmem:[%s3 + $0x1c] sm:$0xf]
  %v98 = vld [vmem:[%s3 + $0x20] sm:$0xf]
  %v99 = vld [vmem:[%s3 + $0x24] sm:$0xf]
  %v100 = vld [vmem:[%s3 + $0x28] sm:$0xf]
  %v101 = vld [vmem:[%s3 + $0x2c] sm:$0xf]
  %v102 = vld [vmem:[%s3 + $0x30] sm:$0xf]
  %v103 = vld [vmem:[%s3 + $0x34] sm:$0xf]
  %v104 = vld [vmem:[%s3 + $0x38] sm:$0xf]
  %v105 = vld [vmem:[%s3 + $0x3c] sm:$0xf]
  %v106 = vld [vmem:[%s3 + $0x40] sm:$0xf]
  %v107 = vld [vmem:[%s3 + $0x44] sm:$0xf]
  %v108 = vld [vmem:[%s3 + $0x48] sm:$0xf]
  %v109 = vld [vmem:[%s3 + $0x4c] sm:$0xf]
  %v110 = vld [vmem:[%s3 + $0x50] sm:$0xf]
  %v111 = vld [vmem:[%s3 + $0x54] sm:$0xf]
  %v112 = vld [vmem:[%s3 + $0x58] sm:$0xf]
  %v113 = vld [vmem:[%s3 + $0x5c] sm:$0xf]
  %v114 = vld [vmem:[%s3 + $0x60] sm:$0xf]
  %v115 = vld [vmem:[%s3 + $0x64] sm:$0xf]
  %v116 = vld [vmem:[%s3 + $0x68] sm:$0xf]
  %v117 = vld [vmem:[%s3 + $0x6c] sm:$0xf]
  %v118 = vld [vmem:[%s3 + $0x70] sm:$0xf]
  %v119 = vld [vmem:[%s3 + $0x74] sm:$0xf]
  %v120 = vld [vmem:[%s3 + $0x78] sm:$0xf]
  %v121 = vld [vmem:[%s3 + $0x7c] sm:$0xf]
  %v122 = vld [vmem:[%s4] sm:$0x1]
  %v124 = vlaneseq
  %v125 = vshrl.u32 %v124, 7
  %v126 = vsub.s32 0, %v125
  %v127 = vrot.slane %v122, %v126
  %v161 = vunpack.c.l.b16 %v90
  %v162 = vunpack.c.l.b16 %v91
  %v163 = vunpack.c.l.b16 %v92
  %v164 = vunpack.c.l.b16 %v93
  %v165 = vunpack.c.l.b16 %v94
  %v166 = vunpack.c.l.b16 %v95
  %v167 = vunpack.c.l.b16 %v96
  %v168 = vunpack.c.l.b16 %v97
  %v169 = vunpack.c.l.b16 %v98
  %v170 = vunpack.c.l.b16 %v99
  %v171 = vunpack.c.l.b16 %v100
  %v172 = vunpack.c.l.b16 %v101
  %v173 = vunpack.c.l.b16 %v102
  %v174 = vunpack.c.l.b16 %v103
  %v175 = vunpack.c.l.b16 %v104
  %v176 = vunpack.c.l.b16 %v105
  %v177 = vunpack.c.l.b16 %v106
  %v178 = vunpack.c.l.b16 %v107
  %v179 = vunpack.c.l.b16 %v108
  %v180 = vunpack.c.l.b16 %v109
  %v181 = vunpack.c.l.b16 %v110
  %v182 = vunpack.c.l.b16 %v111
  %v183 = vunpack.c.l.b16 %v112
  %v184 = vunpack.c.l.b16 %v113
  %v185 = vunpack.c.l.b16 %v114
  %v186 = vunpack.c.l.b16 %v115
  %v187 = vunpack.c.l.b16 %v116
  %v188 = vunpack.c.l.b16 %v117
  %v189 = vunpack.c.l.b16 %v118
  %v190 = vunpack.c.l.b16 %v119
  %v191 = vunpack.c.l.b16 %v120
  %v192 = vunpack.c.l.b16 %v121
  %v193 = vpack.c.b16 %v162, %v161
  %v194 = vpack.c.b16 %v164, %v163
  %v195 = vpack.c.b16 %v166, %v165
  %v196 = vpack.c.b16 %v168, %v167
  %v197 = vpack.c.b16 %v170, %v169
  %v198 = vpack.c.b16 %v172, %v171
  %v199 = vpack.c.b16 %v174, %v173
  %v200 = vpack.c.b16 %v176, %v175
  %v201 = vpack.c.b16 %v178, %v177
  %v202 = vpack.c.b16 %v180, %v179
  %v203 = vpack.c.b16 %v182, %v181
  %v204 = vpack.c.b16 %v184, %v183
  %v205 = vpack.c.b16 %v186, %v185
  %v206 = vpack.c.b16 %v188, %v187
  %v207 = vpack.c.b16 %v190, %v189
  %v208 = vpack.c.b16 %v192, %v191
  %225 = vmatprep.subr.bf16.mxu0 0
  %226 = vmatpush1.bf16.msra.mxu0 %v200
  %227 = vmatprep.subr.bf16.mxu0 0
  %228 = vmatpush1.bf16.msra.mxu0 %v199
  %229 = vmatprep.subr.bf16.mxu0 0
  %230 = vmatpush1.bf16.msra.mxu0 %v198
  %231 = vmatprep.subr.bf16.mxu0 0
  %232 = vmatpush1.bf16.msra.mxu0 %v197
  %233 = vmatprep.subr.bf16.mxu0 0
  %234 = vmatpush1.bf16.msra.mxu0 %v196
  %235 = vmatprep.subr.bf16.mxu0 0
  %236 = vmatpush1.bf16.msra.mxu0 %v195
  %237 = vmatprep.subr.bf16.mxu0 0
  %238 = vmatpush1.bf16.msra.mxu0 %v194
  %239 = vmatprep.subr.bf16.mxu0 0
  %240 = vmatpush1.bf16.msra.mxu0 %v193
  %241 = vmatprep.subr.bf16.mxu0 0
  %242 = vmatpush2.bf16.msra.mxu0 %v208
  %243 = vmatprep.subr.bf16.mxu0 0
  %244 = vmatpush2.bf16.msra.mxu0 %v207
  %245 = vmatprep.subr.bf16.mxu0 0
  %246 = vmatpush2.bf16.msra.mxu0 %v206
  %247 = vmatprep.subr.bf16.mxu0 0
  %248 = vmatpush2.bf16.msra.mxu0 %v205
  %249 = vmatprep.subr.bf16.mxu0 0
  %250 = vmatpush2.bf16.msra.mxu0 %v204
  %251 = vmatprep.subr.bf16.mxu0 0
  %252 = vmatpush2.bf16.msra.mxu0 %v203
  %253 = vmatprep.subr.bf16.mxu0 0
  %254 = vmatpush2.bf16.msra.mxu0 %v202
  %255 = vmatprep.subr.bf16.mxu0 0
  %256 = vmatpush2.bf16.msra.mxu0 %v201
  %257 = vmatprep.mubr.bf16.mxu0 %v87
  %258 = vmatmul.mubr.bf16.gmra.mxu0 %v86
  %v259 = vpop.f32.mrf.mxu0
  %v260 = vadd.f32 %v127, %v259
  %v261 = vpop.f32.mrf.mxu0
  %v262 = vpop.f32.mrf.mxu0
  %v263 = vadd.f32 %v127, %v262
  %v264 = vpop.f32.mrf.mxu0
  %265 = vmatprep.mubr.bf16.mxu0 %v89
  %266 = vmatmul.mubr.bf16.gmra.mxu0 %v88
  %v267 = vpop.f32.mrf.mxu0
  %v268 = vadd.f32 %v127, %v267
  %v269 = vpop.f32.mrf.mxu0
  %v270 = vpop.f32.mrf.mxu0
  %v271 = vadd.f32 %v127, %v270
  %v272 = vpop.f32.mrf.mxu0
  %273 = vdwg.mxu0
  %v274 = vmax.f32 %v260, 0.0
  %v275 = vmax.f32 %v263, 0.0
  %v276 = vmax.f32 %v268, 0.0
  %v277 = vmax.f32 %v271, 0.0
  %v278 = vlaneseq
  %v279 = vshrl.u32 %v278, 7
  %v280 = vadd.s32 %v279, 8
  %v281 = vadd.s32 %v279, 16
  %v282 = vadd.s32 %v279, 24
  %vm283 = vcmp.lt.s32.totalorder %v279, 0
  %v284 = vsub.s32 0, %v279
  %v285 = vsel %vm283, %v284, %v279
  %v286 = vshrl.u32 %v285, 4
  %v287 = vand.u32 %v285, 15
  %v288 = vsub.s32 0, %v287
  %v289 = vsel %vm283, %v288, %v287
  %vm290 = vcmp.lt.s32.totalorder %v280, 0
  %v291 = vsub.s32 0, %v280
  %v292 = vsel %vm290, %v291, %v280
  %v293 = vshrl.u32 %v292, 4
  %v294 = vand.u32 %v292, 15
  %v295 = vsub.s32 0, %v294
  %v296 = vsel %vm290, %v295, %v294
  %vm297 = vcmp.lt.s32.totalorder %v281, 0
  %v298 = vsub.s32 0, %v281
  %v299 = vsel %vm297, %v298, %v281
  %v300 = vshrl.u32 %v299, 4
  %v301 = vand.u32 %v299, 15
  %v302 = vsub.s32 0, %v301
  %v303 = vsel %vm297, %v302, %v301
  %vm304 = vcmp.lt.s32.totalorder %v282, 0
  %v305 = vsub.s32 0, %v282
  %v306 = vsel %vm304, %v305, %v282
  %v307 = vshrl.u32 %v306, 4
  %v308 = vand.u32 %v306, 15
  %v309 = vsub.s32 0, %v308
  %v310 = vsel %vm304, %v309, %v308
  %vm311 = vcmp.ne.s32.totalorder %v289, 0
  %vm312 = vcmp.ne.s32.totalorder %v296, 0
  %vm313 = vcmp.ne.s32.totalorder %v303, 0
  %vm314 = vcmp.ne.s32.totalorder %v310, 0
  %vm315 = vcmp.lt.s32.totalorder %v289, 0
  %vm316 = vcmp.lt.s32.totalorder %v296, 0
  %vm317 = vcmp.lt.s32.totalorder %v303, 0
  %vm318 = vcmp.lt.s32.totalorder %v310, 0
  %vm319 = vmand %vm315, %vm311
  %vm320 = vmand %vm316, %vm312
  %vm321 = vmand %vm317, %vm313
  %vm322 = vmand %vm318, %vm314
  %v323 = vadd.s32 %v289, 16
  %v324 = vadd.s32 %v296, 16
  %v325 = vadd.s32 %v303, 16
  %v326 = vadd.s32 %v310, 16
  %v327 = vsel %vm319, %v323, %v289
  %v328 = vsel %vm320, %v324, %v296
  %v329 = vsel %vm321, %v325, %v303
  %v330 = vsel %vm322, %v326, %v310
  %vm331 = vcmp.eq.s32.totalorder %v327, 0
  %vm332 = vcmp.eq.s32.totalorder %v328, 0
  %vm333 = vcmp.eq.s32.totalorder %v329, 0
  %vm334 = vcmp.eq.s32.totalorder %v330, 0
  %v335 = vrot.slane %v274, 7
  %v336 = vrot.slane %v275, 7
  %v337 = vrot.slane %v276, 7
  %v338 = vrot.slane %v277, 7
  %vm339 = vcmp.lt.s32.totalorder %v279, 1
  %v340 = vsel %vm339, %v337, %v338
  %v341 = vsel %vm339, %v336, %v337
  %v342 = vsel %vm339, %v335, %v336
  %v343 = vsel %vm339, %v338, %v335
  %v344 = vsel %vm331, 0.0, %v343
  %v345 = vsel %vm332, 0.0, %v342
  %v346 = vsel %vm333, 0.0, %v341
  %v347 = vsel %vm334, 0.0, %v340
  %vm348 = vcmp.eq.s32.totalorder %v327, 15
  %vm349 = vcmp.eq.s32.totalorder %v328, 15
  %vm350 = vcmp.eq.s32.totalorder %v329, 15
  %vm351 = vcmp.eq.s32.totalorder %v330, 15
  %v352 = vrot.slane %v274, 1
  %v353 = vrot.slane %v275, 1
  %v354 = vrot.slane %v276, 1
  %v355 = vrot.slane %v277, 1
  %vm356 = vcmp.lt.s32.totalorder %v279, 7
  %v357 = vsel %vm356, %v354, %v355
  %v358 = vsel %vm356, %v353, %v354
  %v359 = vsel %vm356, %v352, %v353
  %v360 = vsel %vm356, %v355, %v352
  %v361 = vsel %vm348, 0.0, %v359
  %v362 = vsel %vm349, 0.0, %v358
  %v363 = vsel %vm350, 0.0, %v357
  %v364 = vsel %vm351, 0.0, %v360
  %369 = vrot.lane.b32.xlu0 %v274, 64
  %v370 = vpop.permute.xlu0 %369
  %371 = vrot.lane.b32.xlu0 %v275, 64
  %v372 = vpop.permute.xlu0 %371
  %373 = vrot.lane.b32.xlu0 %v276, 64
  %v374 = vpop.permute.xlu0 %373
  %375 = vrot.lane.b32.xlu0 %v277, 64
  %v376 = vpop.permute.xlu0 %375
  %vm381 = vcmask 523264
  %v382 = vsel %vm381, %v344, %v370
  %v383 = vsel %vm381, %v345, %v372
  %v384 = vsel %vm381, %v346, %v374
  %v385 = vsel %vm381, %v347, %v376
  %v386 = vpack.c.bf16 %v383, %v382
  %v387 = vpack.c.bf16 %v362, %v361
  %v388 = vpack.c.bf16 %v385, %v384
  %v389 = vpack.c.bf16 %v364, %v363
  %v390 = vld [vmem:[%s5] sm:$0xf]
  %v391 = vld [vmem:[%s5 + $0x4] sm:$0xf]
  %v392 = vld [vmem:[%s5 + $0x8] sm:$0xf]
  %v393 = vld [vmem:[%s5 + $0xc] sm:$0xf]
  %v394 = vld [vmem:[%s5 + $0x10] sm:$0xf]
  %v395 = vld [vmem:[%s5 + $0x14] sm:$0xf]
  %v396 = vld [vmem:[%s5 + $0x18] sm:$0xf]
  %v397 = vld [vmem:[%s5 + $0x1c] sm:$0xf]
  %v398 = vld [vmem:[%s5 + $0x20] sm:$0xf]
  %v399 = vld [vmem:[%s5 + $0x24] sm:$0xf]
  %v400 = vld [vmem:[%s5 + $0x28] sm:$0xf]
  %v401 = vld [vmem:[%s5 + $0x2c] sm:$0xf]
  %v402 = vld [vmem:[%s5 + $0x30] sm:$0xf]
  %v403 = vld [vmem:[%s5 + $0x34] sm:$0xf]
  %v404 = vld [vmem:[%s5 + $0x38] sm:$0xf]
  %v405 = vld [vmem:[%s5 + $0x3c] sm:$0xf]
  %v406 = vld [vmem:[%s5 + $0x40] sm:$0xf]
  %v407 = vld [vmem:[%s5 + $0x44] sm:$0xf]
  %v408 = vld [vmem:[%s5 + $0x48] sm:$0xf]
  %v409 = vld [vmem:[%s5 + $0x4c] sm:$0xf]
  %v410 = vld [vmem:[%s5 + $0x50] sm:$0xf]
  %v411 = vld [vmem:[%s5 + $0x54] sm:$0xf]
  %v412 = vld [vmem:[%s5 + $0x58] sm:$0xf]
  %v413 = vld [vmem:[%s5 + $0x5c] sm:$0xf]
  %v414 = vld [vmem:[%s6] sm:$0x1]
  %v416 = vlaneseq
  %v417 = vshrl.u32 %v416, 7
  %v418 = vsub.s32 0, %v417
  %v419 = vrot.slane %v414, %v418
  %v445 = vunpack.c.l.b16 %v390
  %v446 = vunpack.c.l.b16 %v391
  %v447 = vunpack.c.l.b16 %v392
  %v448 = vunpack.c.l.b16 %v393
  %v449 = vunpack.c.l.b16 %v394
  %v450 = vunpack.c.l.b16 %v395
  %v451 = vunpack.c.l.b16 %v396
  %v452 = vunpack.c.l.b16 %v397
  %v453 = vunpack.c.l.b16 %v398
  %v454 = vunpack.c.l.b16 %v399
  %v455 = vunpack.c.l.b16 %v400
  %v456 = vunpack.c.l.b16 %v401
  %v457 = vunpack.c.l.b16 %v402
  %v458 = vunpack.c.l.b16 %v403
  %v459 = vunpack.c.l.b16 %v404
  %v460 = vunpack.c.l.b16 %v405
  %v461 = vunpack.c.l.b16 %v406
  %v462 = vunpack.c.l.b16 %v407
  %v463 = vunpack.c.l.b16 %v408
  %v464 = vunpack.c.l.b16 %v409
  %v465 = vunpack.c.l.b16 %v410
  %v466 = vunpack.c.l.b16 %v411
  %v467 = vunpack.c.l.b16 %v412
  %v468 = vunpack.c.l.b16 %v413
  %v469 = vpack.c.b16 %v446, %v445
  %v470 = vpack.c.b16 %v448, %v447
  %v471 = vpack.c.b16 %v450, %v449
  %v472 = vpack.c.b16 %v452, %v451
  %v473 = vpack.c.b16 %v454, %v453
  %v474 = vpack.c.b16 %v456, %v455
  %v475 = vpack.c.b16 %v458, %v457
  %v476 = vpack.c.b16 %v460, %v459
  %v477 = vpack.c.b16 %v462, %v461
  %v478 = vpack.c.b16 %v464, %v463
  %v479 = vpack.c.b16 %v466, %v465
  %v480 = vpack.c.b16 %v468, %v467
  %v494 = vsel %vm381, %v387, 0
  %v497 = vsel %vm381, %v389, 0
  %499 = vmatprep.subr.bf16.mxu0 0
  %500 = vmatpush1.bf16.msra.mxu0 %v476
  %501 = vmatprep.subr.bf16.mxu0 0
  %502 = vmatpush1.bf16.msra.mxu0 %v475
  %503 = vmatprep.subr.bf16.mxu0 0
  %504 = vmatpush1.bf16.msra.mxu0 %v474
  %505 = vmatprep.subr.bf16.mxu0 0
  %506 = vmatpush1.bf16.msra.mxu0 %v473
  %507 = vmatprep.subr.bf16.mxu0 0
  %508 = vmatpush1.bf16.msra.mxu0 %v472
  %509 = vmatprep.subr.bf16.mxu0 0
  %510 = vmatpush1.bf16.msra.mxu0 %v471
  %511 = vmatprep.subr.bf16.mxu0 0
  %512 = vmatpush1.bf16.msra.mxu0 %v470
  %513 = vmatprep.subr.bf16.mxu0 0
  %514 = vmatpush1.bf16.msra.mxu0 %v469
  %515 = vmatprep.subr.bf16.mxu0 0
  %516 = vmatpush2.bf16.msra.mxu0 0
  %517 = vmatprep.subr.bf16.mxu0 0
  %518 = vmatpush2.bf16.msra.mxu0 0
  %519 = vmatprep.subr.bf16.mxu0 0
  %520 = vmatpush2.bf16.msra.mxu0 0
  %521 = vmatprep.subr.bf16.mxu0 0
  %522 = vmatpush2.bf16.msra.mxu0 0
  %523 = vmatprep.subr.bf16.mxu0 0
  %524 = vmatpush2.bf16.msra.mxu0 %v480
  %525 = vmatprep.subr.bf16.mxu0 0
  %526 = vmatpush2.bf16.msra.mxu0 %v479
  %527 = vmatprep.subr.bf16.mxu0 0
  %528 = vmatpush2.bf16.msra.mxu0 %v478
  %529 = vmatprep.subr.bf16.mxu0 0
  %530 = vmatpush2.bf16.msra.mxu0 %v477
  %531 = vmatprep.mubr.bf16.mxu0 %v494
  %532 = vmatmul.mubr.bf16.gmra.mxu0 %v386
  %v533 = vpop.f32.mrf.mxu0
  %v534 = vadd.f32 %v419, %v533
  %v535 = vpop.f32.mrf.mxu0
  %v536 = vpop.f32.mrf.mxu0
  %v537 = vadd.f32 %v419, %v536
  %v538 = vpop.f32.mrf.mxu0
  %539 = vmatprep.mubr.bf16.mxu0 %v497
  %540 = vmatmul.mubr.bf16.gmra.mxu0 %v388
  %v541 = vpop.f32.mrf.mxu0
  %v542 = vadd.f32 %v419, %v541
  %v543 = vpop.f32.mrf.mxu0
  %v544 = vpop.f32.mrf.mxu0
  %v545 = vadd.f32 %v419, %v544
  %v546 = vpop.f32.mrf.mxu0
  %547 = vdwg.mxu0
  %v548 = vmax.f32 %v534, 0.0
  %v549 = vmax.f32 %v537, 0.0
  %v550 = vmax.f32 %v542, 0.0
  %v551 = vmax.f32 %v545, 0.0
  %v552 = vpack.c.bf16 %v32, %v30
  %v553 = vpack.c.bf16 %v33, %v31
  %v554 = vpack.c.bf16 %v36, %v34
  %v555 = vpack.c.bf16 %v37, %v35
  %v556 = vpack.c.bf16 %v549, %v548
  %v557 = vpack.c.bf16 %v551, %v550
  %v558 = vld [vmem:[%s7] sm:$0xff]
  %v559 = vld [vmem:[%s7 + $0x8] sm:$0xff]
  %v560 = vld [vmem:[%s7 + $0x10] sm:$0xff]
  %v561 = vld [vmem:[%s7 + $0x18] sm:$0xff]
  %v562 = vld [vmem:[%s7 + $0x20] sm:$0xff]
  %v563 = vld [vmem:[%s7 + $0x28] sm:$0xff]
  %v564 = vld [vmem:[%s7 + $0x30] sm:$0xff]
  %v565 = vld [vmem:[%s7 + $0x38] sm:$0xff]
  %v566 = vld [vmem:[%s7 + $0x40] sm:$0xff]
  %v567 = vld [vmem:[%s7 + $0x48] sm:$0xff]
  %v568 = vld [vmem:[%s7 + $0x50] sm:$0xff]
  %v569 = vld [vmem:[%s7 + $0x58] sm:$0xff]
  %v570 = vld [vmem:[%s7 + $0x60] sm:$0xff]
  %v571 = vld [vmem:[%s7 + $0x68] sm:$0xff]
  %v572 = vld [vmem:[%s7 + $0x70] sm:$0xff]
  %v573 = vld [vmem:[%s7 + $0x78] sm:$0xff]
  %v574 = vld [vmem:[%s7 + $0x80] sm:$0xff]
  %v575 = vld [vmem:[%s7 + $0x88] sm:$0xff]
  %v576 = vld [vmem:[%s7 + $0x90] sm:$0xff]
  %v577 = vld [vmem:[%s7 + $0x98] sm:$0xff]
  %v578 = vld [vmem:[%s7 + $0xa0] sm:$0xff]
  %v579 = vld [vmem:[%s7 + $0xa8] sm:$0xff]
  %v580 = vld [vmem:[%s7 + $0xb0] sm:$0xff]
  %v581 = vld [vmem:[%s7 + $0xb8] sm:$0xff]
  %v582 = vld [vmem:[%s7 + $0xc0] sm:$0xff]
  %v583 = vld [vmem:[%s7 + $0xc8] sm:$0xff]
  %v584 = vld [vmem:[%s7 + $0xd0] sm:$0xff]
  %v585 = vld [vmem:[%s7 + $0xd8] sm:$0xff]
  %v586 = vld [vmem:[%s7 + $0xe0] sm:$0xff]
  %v587 = vld [vmem:[%s7 + $0xe8] sm:$0xff]
  %v588 = vld [vmem:[%s7 + $0xf0] sm:$0xff]
  %v589 = vld [vmem:[%s7 + $0xf8] sm:$0xff]
  %v590 = vld [vmem:[%s7 + $0x100] sm:$0xff]
  %v591 = vld [vmem:[%s7 + $0x108] sm:$0xff]
  %v592 = vld [vmem:[%s7 + $0x110] sm:$0xff]
  %v593 = vld [vmem:[%s7 + $0x118] sm:$0xff]
  %v594 = vld [vmem:[%s7 + $0x120] sm:$0xff]
  %v595 = vld [vmem:[%s7 + $0x128] sm:$0xff]
  %v596 = vld [vmem:[%s7 + $0x130] sm:$0xff]
  %v597 = vld [vmem:[%s7 + $0x138] sm:$0xff]
  %v598 = vld [vmem:[%s7 + $0x140] sm:$0xff]
  %v599 = vld [vmem:[%s7 + $0x148] sm:$0xff]
  %v600 = vld [vmem:[%s7 + $0x150] sm:$0xff]
  %v601 = vld [vmem:[%s7 + $0x158] sm:$0xff]
  %v602 = vld [vmem:[%s7 + $0x160] sm:$0xff]
  %v603 = vld [vmem:[%s7 + $0x168] sm:$0xff]
  %v604 = vld [vmem:[%s7 + $0x170] sm:$0xff]
  %v605 = vld [vmem:[%s7 + $0x178] sm:$0xff]
  %v606 = vld [vmem:[%s7 + $0x180] sm:$0xff]
  %v607 = vld [vmem:[%s7 + $0x188] sm:$0xff]
  %v608 = vld [vmem:[%s7 + $0x190] sm:$0xff]
  %v609 = vld [vmem:[%s7 + $0x198] sm:$0xff]
  %v610 = vld [vmem:[%s7 + $0x1a0] sm:$0xff]
  %v611 = vld [vmem:[%s7 + $0x1a8] sm:$0xff]
  %v612 = vld [vmem:[%s7 + $0x1b0] sm:$0xff]
  %v613 = vld [vmem:[%s7 + $0x1b8] sm:$0xff]
  %v614 = vld [vmem:[%s7 + $0x1c0] sm:$0xff]
  %v615 = vld [vmem:[%s7 + $0x1c8] sm:$0xff]
  %v616 = vld [vmem:[%s7 + $0x1d0] sm:$0xff]
  %v617 = vld [vmem:[%s7 + $0x1d8] sm:$0xff]
  %v618 = vld [vmem:[%s7 + $0x1e0] sm:$0xff]
  %v619 = vld [vmem:[%s7 + $0x1e8] sm:$0xff]
  %v620 = vld [vmem:[%s7 + $0x1f0] sm:$0xff]
  %v621 = vld [vmem:[%s7 + $0x1f8] sm:$0xff]
  %v622 = vld [vmem:[%s7 + $0x200] sm:$0xff]
  %v623 = vld [vmem:[%s7 + $0x208] sm:$0xff]
  %v624 = vld [vmem:[%s7 + $0x210] sm:$0xff]
  %v625 = vld [vmem:[%s7 + $0x218] sm:$0xff]
  %v626 = vld [vmem:[%s7 + $0x220] sm:$0xff]
  %v627 = vld [vmem:[%s7 + $0x228] sm:$0xff]
  %v628 = vld [vmem:[%s7 + $0x230] sm:$0xff]
  %v629 = vld [vmem:[%s7 + $0x238] sm:$0xff]
  %v630 = vld [vmem:[%s7 + $0x240] sm:$0xff]
  %v631 = vld [vmem:[%s7 + $0x248] sm:$0xff]
  %v632 = vld [vmem:[%s7 + $0x250] sm:$0xff]
  %v633 = vld [vmem:[%s7 + $0x258] sm:$0xff]
  %v634 = vld [vmem:[%s7 + $0x260] sm:$0xff]
  %v635 = vld [vmem:[%s7 + $0x268] sm:$0xff]
  %v636 = vld [vmem:[%s7 + $0x270] sm:$0xff]
  %v637 = vld [vmem:[%s7 + $0x278] sm:$0xff]
  %v718 = vunpack.c.l.b16 %v558
  %v719 = vunpack.c.h.b16 %v558
  %v720 = vunpack.c.l.b16 %v559
  %v721 = vunpack.c.h.b16 %v559
  %v722 = vunpack.c.l.b16 %v560
  %v723 = vunpack.c.h.b16 %v560
  %v724 = vunpack.c.l.b16 %v561
  %v725 = vunpack.c.h.b16 %v561
  %v726 = vunpack.c.l.b16 %v562
  %v727 = vunpack.c.h.b16 %v562
  %v728 = vunpack.c.l.b16 %v563
  %v729 = vunpack.c.h.b16 %v563
  %v730 = vunpack.c.l.b16 %v564
  %v731 = vunpack.c.h.b16 %v564
  %v732 = vunpack.c.l.b16 %v565
  %v733 = vunpack.c.h.b16 %v565
  %v734 = vunpack.c.l.b16 %v566
  %v735 = vunpack.c.h.b16 %v566
  %v736 = vunpack.c.l.b16 %v567
  %v737 = vunpack.c.h.b16 %v567
  %v738 = vunpack.c.l.b16 %v568
  %v739 = vunpack.c.h.b16 %v568
  %v740 = vunpack.c.l.b16 %v569
  %v741 = vunpack.c.h.b16 %v569
  %v742 = vunpack.c.l.b16 %v570
  %v743 = vunpack.c.h.b16 %v570
  %v744 = vunpack.c.l.b16 %v571
  %v745 = vunpack.c.h.b16 %v571
  %v746 = vunpack.c.l.b16 %v572
  %v747 = vunpack.c.h.b16 %v572
  %v748 = vunpack.c.l.b16 %v573
  %v749 = vunpack.c.h.b16 %v573
  %v750 = vunpack.c.l.b16 %v574
  %v751 = vunpack.c.h.b16 %v574
  %v752 = vunpack.c.l.b16 %v575
  %v753 = vunpack.c.h.b16 %v575
  %v754 = vunpack.c.l.b16 %v576
  %v755 = vunpack.c.h.b16 %v576
  %v756 = vunpack.c.l.b16 %v577
  %v757 = vunpack.c.h.b16 %v577
  %v758 = vunpack.c.l.b16 %v578
  %v759 = vunpack.c.h.b16 %v578
  %v760 = vunpack.c.l.b16 %v579
  %v761 = vunpack.c.h.b16 %v579
  %v762 = vunpack.c.l.b16 %v580
  %v763 = vunpack.c.h.b16 %v580
  %v764 = vunpack.c.l.b16 %v581
  %v765 = vunpack.c.h.b16 %v581
  %v766 = vunpack.c.l.b16 %v582
  %v767 = vunpack.c.h.b16 %v582
  %v768 = vunpack.c.l.b16 %v583
  %v769 = vunpack.c.h.b16 %v583
  %v770 = vunpack.c.l.b16 %v584
  %v771 = vunpack.c.h.b16 %v584
  %v772 = vunpack.c.l.b16 %v585
  %v773 = vunpack.c.h.b16 %v585
  %v774 = vunpack.c.l.b16 %v586
  %v775 = vunpack.c.h.b16 %v586
  %v776 = vunpack.c.l.b16 %v587
  %v777 = vunpack.c.h.b16 %v587
  %v778 = vunpack.c.l.b16 %v588
  %v779 = vunpack.c.h.b16 %v588
  %v780 = vunpack.c.l.b16 %v589
  %v781 = vunpack.c.h.b16 %v589
  %v782 = vunpack.c.l.b16 %v590
  %v783 = vunpack.c.h.b16 %v590
  %v784 = vunpack.c.l.b16 %v591
  %v785 = vunpack.c.h.b16 %v591
  %v786 = vunpack.c.l.b16 %v592
  %v787 = vunpack.c.h.b16 %v592
  %v788 = vunpack.c.l.b16 %v593
  %v789 = vunpack.c.h.b16 %v593
  %v790 = vunpack.c.l.b16 %v594
  %v791 = vunpack.c.h.b16 %v594
  %v792 = vunpack.c.l.b16 %v595
  %v793 = vunpack.c.h.b16 %v595
  %v794 = vunpack.c.l.b16 %v596
  %v795 = vunpack.c.h.b16 %v596
  %v796 = vunpack.c.l.b16 %v597
  %v797 = vunpack.c.h.b16 %v597
  %v798 = vunpack.c.l.b16 %v598
  %v799 = vunpack.c.h.b16 %v598
  %v800 = vunpack.c.l.b16 %v599
  %v801 = vunpack.c.h.b16 %v599
  %v802 = vunpack.c.l.b16 %v600
  %v803 = vunpack.c.h.b16 %v600
  %v804 = vunpack.c.l.b16 %v601
  %v805 = vunpack.c.h.b16 %v601
  %v806 = vunpack.c.l.b16 %v602
  %v807 = vunpack.c.h.b16 %v602
  %v808 = vunpack.c.l.b16 %v603
  %v809 = vunpack.c.h.b16 %v603
  %v810 = vunpack.c.l.b16 %v604
  %v811 = vunpack.c.h.b16 %v604
  %v812 = vunpack.c.l.b16 %v605
  %v813 = vunpack.c.h.b16 %v605
  %v814 = vunpack.c.l.b16 %v606
  %v815 = vunpack.c.h.b16 %v606
  %v816 = vunpack.c.l.b16 %v607
  %v817 = vunpack.c.h.b16 %v607
  %v818 = vunpack.c.l.b16 %v608
  %v819 = vunpack.c.h.b16 %v608
  %v820 = vunpack.c.l.b16 %v609
  %v821 = vunpack.c.h.b16 %v609
  %v822 = vunpack.c.l.b16 %v610
  %v823 = vunpack.c.h.b16 %v610
  %v824 = vunpack.c.l.b16 %v611
  %v825 = vunpack.c.h.b16 %v611
  %v826 = vunpack.c.l.b16 %v612
  %v827 = vunpack.c.h.b16 %v612
  %v828 = vunpack.c.l.b16 %v613
  %v829 = vunpack.c.h.b16 %v613
  %v830 = vunpack.c.l.b16 %v614
  %v831 = vunpack.c.h.b16 %v614
  %v832 = vunpack.c.l.b16 %v615
  %v833 = vunpack.c.h.b16 %v615
  %v834 = vunpack.c.l.b16 %v616
  %v835 = vunpack.c.h.b16 %v616
  %v836 = vunpack.c.l.b16 %v617
  %v837 = vunpack.c.h.b16 %v617
  %v838 = vunpack.c.l.b16 %v618
  %v839 = vunpack.c.h.b16 %v618
  %v840 = vunpack.c.l.b16 %v619
  %v841 = vunpack.c.h.b16 %v619
  %v842 = vunpack.c.l.b16 %v620
  %v843 = vunpack.c.h.b16 %v620
  %v844 = vunpack.c.l.b16 %v621
  %v845 = vunpack.c.h.b16 %v621
  %v846 = vunpack.c.l.b16 %v622
  %v847 = vunpack.c.h.b16 %v622
  %v848 = vunpack.c.l.b16 %v623
  %v849 = vunpack.c.h.b16 %v623
  %v850 = vunpack.c.l.b16 %v624
  %v851 = vunpack.c.h.b16 %v624
  %v852 = vunpack.c.l.b16 %v625
  %v853 = vunpack.c.h.b16 %v625
  %v854 = vunpack.c.l.b16 %v626
  %v855 = vunpack.c.h.b16 %v626
  %v856 = vunpack.c.l.b16 %v627
  %v857 = vunpack.c.h.b16 %v627
  %v858 = vunpack.c.l.b16 %v628
  %v859 = vunpack.c.h.b16 %v628
  %v860 = vunpack.c.l.b16 %v629
  %v861 = vunpack.c.h.b16 %v629
  %v862 = vunpack.c.l.b16 %v630
  %v863 = vunpack.c.h.b16 %v630
  %v864 = vunpack.c.l.b16 %v631
  %v865 = vunpack.c.h.b16 %v631
  %v866 = vunpack.c.l.b16 %v632
  %v867 = vunpack.c.h.b16 %v632
  %v868 = vunpack.c.l.b16 %v633
  %v869 = vunpack.c.h.b16 %v633
  %v870 = vunpack.c.l.b16 %v634
  %v871 = vunpack.c.h.b16 %v634
  %v872 = vunpack.c.l.b16 %v635
  %v873 = vunpack.c.h.b16 %v635
  %v874 = vunpack.c.l.b16 %v636
  %v875 = vunpack.c.h.b16 %v636
  %v876 = vunpack.c.l.b16 %v637
  %v877 = vunpack.c.h.b16 %v637
  %v878 = vpack.c.b16 %v722, %v718
  %v879 = vpack.c.b16 %v723, %v719
  %v880 = vpack.c.b16 %v724, %v720
  %v881 = vpack.c.b16 %v725, %v721
  %v882 = vpack.c.b16 %v730, %v726
  %v883 = vpack.c.b16 %v731, %v727
  %v884 = vpack.c.b16 %v732, %v728
  %v885 = vpack.c.b16 %v733, %v729
  %v886 = vpack.c.b16 %v738, %v734
  %v887 = vpack.c.b16 %v739, %v735
  %v888 = vpack.c.b16 %v740, %v736
  %v889 = vpack.c.b16 %v741, %v737
  %v890 = vpack.c.b16 %v746, %v742
  %v891 = vpack.c.b16 %v747, %v743
  %v892 = vpack.c.b16 %v748, %v744
  %v893 = vpack.c.b16 %v749, %v745
  %v894 = vpack.c.b16 %v754, %v750
  %v895 = vpack.c.b16 %v755, %v751
  %v896 = vpack.c.b16 %v756, %v752
  %v897 = vpack.c.b16 %v757, %v753
  %v898 = vpack.c.b16 %v762, %v758
  %v899 = vpack.c.b16 %v763, %v759
  %v900 = vpack.c.b16 %v764, %v760
  %v901 = vpack.c.b16 %v765, %v761
  %v902 = vpack.c.b16 %v770, %v766
  %v903 = vpack.c.b16 %v771, %v767
  %v904 = vpack.c.b16 %v772, %v768
  %v905 = vpack.c.b16 %v773, %v769
  %v906 = vpack.c.b16 %v778, %v774
  %v907 = vpack.c.b16 %v779, %v775
  %v908 = vpack.c.b16 %v780, %v776
  %v909 = vpack.c.b16 %v781, %v777
  %v910 = vpack.c.b16 %v786, %v782
  %v911 = vpack.c.b16 %v787, %v783
  %v912 = vpack.c.b16 %v788, %v784
  %v913 = vpack.c.b16 %v789, %v785
  %v914 = vpack.c.b16 %v794, %v790
  %v915 = vpack.c.b16 %v795, %v791
  %v916 = vpack.c.b16 %v796, %v792
  %v917 = vpack.c.b16 %v797, %v793
  %v918 = vpack.c.b16 %v802, %v798
  %v919 = vpack.c.b16 %v803, %v799
  %v920 = vpack.c.b16 %v804, %v800
  %v921 = vpack.c.b16 %v805, %v801
  %v922 = vpack.c.b16 %v810, %v806
  %v923 = vpack.c.b16 %v811, %v807
  %v924 = vpack.c.b16 %v812, %v808
  %v925 = vpack.c.b16 %v813, %v809
  %v926 = vpack.c.b16 %v818, %v814
  %v927 = vpack.c.b16 %v819, %v815
  %v928 = vpack.c.b16 %v820, %v816
  %v929 = vpack.c.b16 %v821, %v817
  %v930 = vpack.c.b16 %v826, %v822
  %v931 = vpack.c.b16 %v827, %v823
  %v932 = vpack.c.b16 %v828, %v824
  %v933 = vpack.c.b16 %v829, %v825
  %v934 = vpack.c.b16 %v834, %v830
  %v935 = vpack.c.b16 %v835, %v831
  %v936 = vpack.c.b16 %v836, %v832
  %v937 = vpack.c.b16 %v837, %v833
  %v938 = vpack.c.b16 %v842, %v838
  %v939 = vpack.c.b16 %v843, %v839
  %v940 = vpack.c.b16 %v844, %v840
  %v941 = vpack.c.b16 %v845, %v841
  %v942 = vpack.c.b16 %v850, %v846
  %v943 = vpack.c.b16 %v851, %v847
  %v944 = vpack.c.b16 %v852, %v848
  %v945 = vpack.c.b16 %v853, %v849
  %v946 = vpack.c.b16 %v858, %v854
  %v947 = vpack.c.b16 %v859, %v855
  %v948 = vpack.c.b16 %v860, %v856
  %v949 = vpack.c.b16 %v861, %v857
  %v950 = vpack.c.b16 %v866, %v862
  %v951 = vpack.c.b16 %v867, %v863
  %v952 = vpack.c.b16 %v868, %v864
  %v953 = vpack.c.b16 %v869, %v865
  %v954 = vpack.c.b16 %v874, %v870
  %v955 = vpack.c.b16 %v875, %v871
  %v956 = vpack.c.b16 %v876, %v872
  %v957 = vpack.c.b16 %v877, %v873
  %v1039 = vsel %vm381, %v556, 0
  %v1042 = vsel %vm381, %v557, 0
  %1044 = vmatprep.subr.bf16.mxu0 %v907
  %1045 = vmatpush1.bf16.msra.mxu0 %v906
  %1046 = vmatprep.subr.bf16.mxu0 %v903
  %1047 = vmatpush1.bf16.msra.mxu0 %v902
  %1048 = vmatprep.subr.bf16.mxu0 %v899
  %1049 = vmatpush1.bf16.msra.mxu0 %v898
  %1050 = vmatprep.subr.bf16.mxu0 %v895
  %1051 = vmatpush1.bf16.msra.mxu0 %v894
  %1052 = vmatprep.subr.bf16.mxu0 %v891
  %1053 = vmatpush1.bf16.msra.mxu0 %v890
  %1054 = vmatprep.subr.bf16.mxu0 %v887
  %1055 = vmatpush1.bf16.msra.mxu0 %v886
  %1056 = vmatprep.subr.bf16.mxu0 %v883
  %1057 = vmatpush1.bf16.msra.mxu0 %v882
  %1058 = vmatprep.subr.bf16.mxu0 %v879
  %1059 = vmatpush1.bf16.msra.mxu0 %v878
  %1060 = vmatprep.subr.bf16.mxu0 %v939
  %1061 = vmatpush2.bf16.msra.mxu0 %v938
  %1062 = vmatprep.subr.bf16.mxu0 %v935
  %1063 = vmatpush2.bf16.msra.mxu0 %v934
  %1064 = vmatprep.subr.bf16.mxu0 %v931
  %1065 = vmatpush2.bf16.msra.mxu0 %v930
  %1066 = vmatprep.subr.bf16.mxu0 %v927
  %1067 = vmatpush2.bf16.msra.mxu0 %v926
  %1068 = vmatprep.subr.bf16.mxu0 %v923
  %1069 = vmatpush2.bf16.msra.mxu0 %v922
  %1070 = vmatprep.subr.bf16.mxu0 %v919
  %1071 = vmatpush2.bf16.msra.mxu0 %v918
  %1072 = vmatprep.subr.bf16.mxu0 %v915
  %1073 = vmatpush2.bf16.msra.mxu0 %v914
  %1074 = vmatprep.subr.bf16.mxu0 %v911
  %1075 = vmatpush2.bf16.msra.mxu0 %v910
  %1076 = vmatprep.mubr.bf16.mxu0 %v553
  %1077 = vmatmul.mubr.bf16.gmra.mxu0 %v552
  %v1078 = vpop.f32.mrf.mxu0
  %v1079 = vadd.f32 0.0, %v1078
  %v1080 = vpop.f32.mrf.mxu0
  %v1081 = vadd.f32 0.0, %v1080
  %v1082 = vpop.f32.mrf.mxu0
  %v1083 = vadd.f32 0.0, %v1082
  %v1084 = vpop.f32.mrf.mxu0
  %v1085 = vadd.f32 0.0, %v1084
  %1086 = vmatprep.mubr.bf16.mxu0 %v555
  %1087 = vmatmul.mubr.bf16.gmra.mxu0 %v554
  %v1088 = vpop.f32.mrf.mxu0
  %v1089 = vadd.f32 0.0, %v1088
  %v1090 = vpop.f32.mrf.mxu0
  %v1091 = vadd.f32 0.0, %v1090
  %v1092 = vpop.f32.mrf.mxu0
  %v1093 = vadd.f32 0.0, %v1092
  %v1094 = vpop.f32.mrf.mxu0
  %v1095 = vadd.f32 0.0, %v1094
  %1096 = vdwg.mxu0
  %1097 = vmatprep.subr.bf16.mxu0 0
  %1098 = vmatpush1.bf16.msra.mxu0 0
  %1099 = vmatprep.subr.bf16.mxu0 0
  %1100 = vmatpush1.bf16.msra.mxu0 0
  %1101 = vmatprep.subr.bf16.mxu0 0
  %1102 = vmatpush1.bf16.msra.mxu0 0
  %1103 = vmatprep.subr.bf16.mxu0 0
  %1104 = vmatpush1.bf16.msra.mxu0 0
  %1105 = vmatprep.subr.bf16.mxu0 %v955
  %1106 = vmatpush1.bf16.msra.mxu0 %v954
  %1107 = vmatprep.subr.bf16.mxu0 %v951
  %1108 = vmatpush1.bf16.msra.mxu0 %v950
  %1109 = vmatprep.subr.bf16.mxu0 %v947
  %1110 = vmatpush1.bf16.msra.mxu0 %v946
  %1111 = vmatprep.subr.bf16.mxu0 %v943
  %1112 = vmatpush1.bf16.msra.mxu0 %v942
  %1113 = vmatprep.subr.bf16.mxu0 0
  %1114 = vmatpush2.bf16.msra.mxu0 0
  %1115 = vmatprep.subr.bf16.mxu0 0
  %1116 = vmatpush2.bf16.msra.mxu0 0
  %1117 = vmatprep.subr.bf16.mxu0 0
  %1118 = vmatpush2.bf16.msra.mxu0 0
  %1119 = vmatprep.subr.bf16.mxu0 0
  %1120 = vmatpush2.bf16.msra.mxu0 0
  %1121 = vmatprep.subr.bf16.mxu0 0
  %1122 = vmatpush2.bf16.msra.mxu0 0
  %1123 = vmatprep.subr.bf16.mxu0 0
  %1124 = vmatpush2.bf16.msra.mxu0 0
  %1125 = vmatprep.subr.bf16.mxu0 0
  %1126 = vmatpush2.bf16.msra.mxu0 0
  %1127 = vmatprep.subr.bf16.mxu0 0
  %1128 = vmatpush2.bf16.msra.mxu0 0
  %1129 = vmatprep.mubr.bf16.mxu0 0
  %1130 = vmatmul.mubr.bf16.gmra.mxu0 %v1039
  %v1131 = vpop.f32.mrf.mxu0
  %v1132 = vadd.f32 %v1079, %v1131
  %v1133 = vpop.f32.mrf.mxu0
  %v1134 = vadd.f32 %v1081, %v1133
  %v1135 = vpop.f32.mrf.mxu0
  %v1136 = vadd.f32 %v1083, %v1135
  %v1137 = vpop.f32.mrf.mxu0
  %v1138 = vadd.f32 %v1085, %v1137
  %1139 = vmatprep.mubr.bf16.mxu0 0
  %1140 = vmatmul.mubr.bf16.gmra.mxu0 %v1042
  %v1141 = vpop.f32.mrf.mxu0
  %v1142 = vadd.f32 %v1089, %v1141
  %v1143 = vpop.f32.mrf.mxu0
  %v1144 = vadd.f32 %v1091, %v1143
  %v1145 = vpop.f32.mrf.mxu0
  %v1146 = vadd.f32 %v1093, %v1145
  %v1147 = vpop.f32.mrf.mxu0
  %v1148 = vadd.f32 %v1095, %v1147
  %1149 = vdwg.mxu0
  %1150 = vmatprep.subr.bf16.mxu0 %v909
  %1151 = vmatpush1.bf16.msra.mxu0 %v908
  %1152 = vmatprep.subr.bf16.mxu0 %v905
  %1153 = vmatpush1.bf16.msra.mxu0 %v904
  %1154 = vmatprep.subr.bf16.mxu0 %v901
  %1155 = vmatpush1.bf16.msra.mxu0 %v900
  %1156 = vmatprep.subr.bf16.mxu0 %v897
  %1157 = vmatpush1.bf16.msra.mxu0 %v896
  %1158 = vmatprep.subr.bf16.mxu0 %v893
  %1159 = vmatpush1.bf16.msra.mxu0 %v892
  %1160 = vmatprep.subr.bf16.mxu0 %v889
  %1161 = vmatpush1.bf16.msra.mxu0 %v888
  %1162 = vmatprep.subr.bf16.mxu0 %v885
  %1163 = vmatpush1.bf16.msra.mxu0 %v884
  %1164 = vmatprep.subr.bf16.mxu0 %v881
  %1165 = vmatpush1.bf16.msra.mxu0 %v880
  %1166 = vmatprep.subr.bf16.mxu0 %v941
  %1167 = vmatpush2.bf16.msra.mxu0 %v940
  %1168 = vmatprep.subr.bf16.mxu0 %v937
  %1169 = vmatpush2.bf16.msra.mxu0 %v936
  %1170 = vmatprep.subr.bf16.mxu0 %v933
  %1171 = vmatpush2.bf16.msra.mxu0 %v932
  %1172 = vmatprep.subr.bf16.mxu0 %v929
  %1173 = vmatpush2.bf16.msra.mxu0 %v928
  %1174 = vmatprep.subr.bf16.mxu0 %v925
  %1175 = vmatpush2.bf16.msra.mxu0 %v924
  %1176 = vmatprep.subr.bf16.mxu0 %v921
  %1177 = vmatpush2.bf16.msra.mxu0 %v920
  %1178 = vmatprep.subr.bf16.mxu0 %v917
  %1179 = vmatpush2.bf16.msra.mxu0 %v916
  %1180 = vmatprep.subr.bf16.mxu0 %v913
  %1181 = vmatpush2.bf16.msra.mxu0 %v912
  %1182 = vmatprep.mubr.bf16.mxu0 %v553
  %1183 = vmatmul.mubr.bf16.gmra.mxu0 %v552
  %v1184 = vpop.f32.mrf.mxu0
  %v1185 = vadd.f32 0.0, %v1184
  %v1186 = vpop.f32.mrf.mxu0
  %v1187 = vadd.f32 0.0, %v1186
  %v1188 = vpop.f32.mrf.mxu0
  %v1189 = vadd.f32 0.0, %v1188
  %v1190 = vpop.f32.mrf.mxu0
  %v1191 = vadd.f32 0.0, %v1190
  %1192 = vmatprep.mubr.bf16.mxu0 %v555
  %1193 = vmatmul.mubr.bf16.gmra.mxu0 %v554
  %v1194 = vpop.f32.mrf.mxu0
  %v1195 = vadd.f32 0.0, %v1194
  %v1196 = vpop.f32.mrf.mxu0
  %v1197 = vadd.f32 0.0, %v1196
  %v1198 = vpop.f32.mrf.mxu0
  %v1199 = vadd.f32 0.0, %v1198
  %v1200 = vpop.f32.mrf.mxu0
  %v1201 = vadd.f32 0.0, %v1200
  %1202 = vdwg.mxu0
  %1203 = vmatprep.subr.bf16.mxu0 0
  %1204 = vmatpush1.bf16.msra.mxu0 0
  %1205 = vmatprep.subr.bf16.mxu0 0
  %1206 = vmatpush1.bf16.msra.mxu0 0
  %1207 = vmatprep.subr.bf16.mxu0 0
  %1208 = vmatpush1.bf16.msra.mxu0 0
  %1209 = vmatprep.subr.bf16.mxu0 0
  %1210 = vmatpush1.bf16.msra.mxu0 0
  %1211 = vmatprep.subr.bf16.mxu0 %v957
  %1212 = vmatpush1.bf16.msra.mxu0 %v956
  %1213 = vmatprep.subr.bf16.mxu0 %v953
  %1214 = vmatpush1.bf16.msra.mxu0 %v952
  %1215 = vmatprep.subr.bf16.mxu0 %v949
  %1216 = vmatpush1.bf16.msra.mxu0 %v948
  %1217 = vmatprep.subr.bf16.mxu0 %v945
  %1218 = vmatpush1.bf16.msra.mxu0 %v944
  %1219 = vmatprep.subr.bf16.mxu0 0
  %1220 = vmatpush2.bf16.msra.mxu0 0
  %1221 = vmatprep.subr.bf16.mxu0 0
  %1222 = vmatpush2.bf16.msra.mxu0 0
  %1223 = vmatprep.subr.bf16.mxu0 0
  %1224 = vmatpush2.bf16.msra.mxu0 0
  %1225 = vmatprep.subr.bf16.mxu0 0
  %1226 = vmatpush2.bf16.msra.mxu0 0
  %1227 = vmatprep.subr.bf16.mxu0 0
  %1228 = vmatpush2.bf16.msra.mxu0 0
  %1229 = vmatprep.subr.bf16.mxu0 0
  %1230 = vmatpush2.bf16.msra.mxu0 0
  %1231 = vmatprep.subr.bf16.mxu0 0
  %1232 = vmatpush2.bf16.msra.mxu0 0
  %1233 = vmatprep.subr.bf16.mxu0 0
  %1234 = vmatpush2.bf16.msra.mxu0 0
  %1235 = vmatprep.mubr.bf16.mxu0 0
  %1236 = vmatmul.mubr.bf16.gmra.mxu0 %v1039
  %v1237 = vpop.f32.mrf.mxu0
  %v1238 = vadd.f32 %v1185, %v1237
  %v1239 = vpop.f32.mrf.mxu0
  %v1240 = vadd.f32 %v1187, %v1239
  %v1241 = vpop.f32.mrf.mxu0
  %v1242 = vadd.f32 %v1189, %v1241
  %v1243 = vpop.f32.mrf.mxu0
  %v1244 = vadd.f32 %v1191, %v1243
  %1245 = vmatprep.mubr.bf16.mxu0 0
  %1246 = vmatmul.mubr.bf16.gmra.mxu0 %v1042
  %v1247 = vpop.f32.mrf.mxu0
  %v1248 = vadd.f32 %v1195, %v1247
  %v1249 = vpop.f32.mrf.mxu0
  %v1250 = vadd.f32 %v1197, %v1249
  %v1251 = vpop.f32.mrf.mxu0
  %v1252 = vadd.f32 %v1199, %v1251
  %v1253 = vpop.f32.mrf.mxu0
  %v1254 = vadd.f32 %v1201, %v1253
  %1255 = vdwg.mxu0
  %1256 = vst [vmem:[%s8] sm:$0xff] %v1132
  %1257 = vst [vmem:[%s8 + $0x8] sm:$0xff] %v1134
  %1258 = vst [vmem:[%s8 + $0x10] sm:$0xff] %v1238
  %1259 = vst [vmem:[%s8 + $0x18] sm:$0xff] %v1240
  %1260 = vst [vmem:[%s8 + $0x20] sm:$0xff] %v1136
  %1261 = vst [vmem:[%s8 + $0x28] sm:$0xff] %v1138
  %1262 = vst [vmem:[%s8 + $0x30] sm:$0xff] %v1242
  %1263 = vst [vmem:[%s8 + $0x38] sm:$0xff] %v1244
  %1264 = vst [vmem:[%s8 + $0x40] sm:$0xff] %v1142
  %1265 = vst [vmem:[%s8 + $0x48] sm:$0xff] %v1144
  %1266 = vst [vmem:[%s8 + $0x50] sm:$0xff] %v1248
  %1267 = vst [vmem:[%s8 + $0x58] sm:$0xff] %v1250
  %1268 = vst [vmem:[%s8 + $0x60] sm:$0xff] %v1146
  %1269 = vst [vmem:[%s8 + $0x68] sm:$0xff] %v1148
  %1270 = vst [vmem:[%s8 + $0x70] sm:$0xff] %v1252
  %1271 = vst [vmem:[%s8 + $0x78] sm:$0xff] %v1254
  // Predicated region
  $region34: #{bottleneck_forward.1} parent=0 // pred_check
    _
  $region35: #{bottleneck_forward.1} parent=0 // pred_check_branch
    %1273 = sbr.rel (0) target = $region37
  $region36: #{bottleneck_forward.1} parent=0 // pred_region
    _
  $region37: #{bottleneck_forward.1} parent=0 // pred_fallthru
    _
  // Predicated region
  $region38: #{bottleneck_forward.1} parent=0 // pred_check
    _
  $region39: #{bottleneck_forward.1} parent=0 // pred_check_branch
    %1275 = sbr.rel (0) target = $region41
  $region40: #{bottleneck_forward.1} parent=0 // pred_region
    _
  $region41: #{bottleneck_forward.1} parent=0 // pred_fallthru
    _

</llo_original>
